<compile_context>
chip_gen: v5e
topology: v5e:2x2
jax: 0.10.0
libtpu: 0.0.40
codegen_flags: <defaults>
</compile_context>

<pallas_src>
import jax
import jax.numpy as jnp
from jax import lax
from jax.experimental import pallas as pl
from jax.experimental.pallas import tpu as pltpu


def _round_up(v, m):
    return (v + m - 1) // m * m


def _make_vgae_kernel(tile_r):
    def _vgae_fused_kernel(x_ref, adj_ref, w1_ref, wmu_ref, o_ref, z_ref):
        i = pl.program_id(0)

        # ---- Encoder: run once, keep z resident in VMEM scratch across all grid steps ----
        @pl.when(i == 0)
        def _():
            adj = adj_ref[...]
            # GCN layer 1: h = relu(adj @ (x @ W1))   (dropout is identity in eval mode)
            support1 = jnp.dot(
                x_ref[...], w1_ref[...], preferred_element_type=jnp.float32
            )
            h = jnp.maximum(
                jnp.dot(adj, support1, preferred_element_type=jnp.float32), 0.0
            )
            # GCN mu head: mu = adj @ (h @ W_mu)      (no activation); z = mu in eval mode
            support2 = jnp.dot(h, wmu_ref[...], preferred_element_type=jnp.float32)
            z_ref[...] = jnp.dot(adj, support2, preferred_element_type=jnp.float32)

        # ---- Decoder: mx[rows] = z[rows] @ z.T, one lane-dense row slab per grid step ----
        r0 = pl.multiple_of(i * tile_r, tile_r)
        z_rows = z_ref[pl.ds(r0, tile_r), :]
        mx_tile = lax.dot_general(
            z_rows,
            z_ref[...],
            dimension_numbers=(((1,), (1,)), ((), ())),
            preferred_element_type=jnp.float32,
        )
        o_ref[...] = mx_tile.astype(o_ref.dtype)

    return _vgae_fused_kernel


@jax.jit
def vgae_forward(x, adj, w1, w_mu):
    """Fused VGAE forward (eval mode). Returns reconstruction logits (N, N)."""
    x = x.astype(jnp.float32)
    adj = adj.astype(jnp.float32)
    w1 = w1.astype(jnp.float32)
    w_mu = w_mu.astype(jnp.float32)

    N, f_in = x.shape
    h1 = w1.shape[1]
    h2 = w_mu.shape[1]

    # Pad everything to 128-aligned shapes: lane-dense output stores + full MXU tiles.
    n_p = _round_up(N, 128)
    f_in_p = _round_up(f_in, 128)
    h1_p = _round_up(h1, 128)
    h2_p = _round_up(h2, 128)

    x_p = jnp.zeros((n_p, f_in_p), jnp.float32).at[:N, :f_in].set(x)
    adj_p = jnp.zeros((n_p, n_p), jnp.float32).at[:N, :N].set(adj)
    w1_p = jnp.zeros((f_in_p, h1_p), jnp.float32).at[:f_in, :h1].set(w1)
    wmu_p = jnp.zeros((h1_p, h2_p), jnp.float32).at[:h1, :h2].set(w_mu)

    # Row-tile the decoder output; bigger slabs when they divide evenly (fewer grid steps).
    tile_r = 256 if (n_p % 256 == 0) else 128
    n_tiles = n_p // tile_r

    mx_p = pl.pallas_call(
        _make_vgae_kernel(tile_r),
        out_shape=jax.ShapeDtypeStruct((n_p, n_p), jnp.float32),
        grid=(n_tiles,),
        in_specs=[
            pl.BlockSpec((n_p, f_in_p), lambda i: (0, 0)),
            pl.BlockSpec((n_p, n_p), lambda i: (0, 0)),
            pl.BlockSpec((f_in_p, h1_p), lambda i: (0, 0)),
            pl.BlockSpec((h1_p, h2_p), lambda i: (0, 0)),
        ],
        out_specs=pl.BlockSpec((tile_r, n_p), lambda i: (i, 0)),
        scratch_shapes=[pltpu.VMEM((n_p, h2_p), jnp.float32)],
        compiler_params=pltpu.CompilerParams(
            # scratch z carries a dependence from step 0 to all later steps -> sequential axis
            dimension_semantics=("arbitrary",),
            vmem_limit_bytes=64 << 20,
        ),
    )(x_p, adj_p, w1_p, wmu_p)

    return mx_p[:N, :N]


def init_params(key, in_c, hid_c1, hid_c2):
    k1, k2, k3 = jax.random.split(key, 3)

    def glorot(k, fan_in, fan_out):
        limit = jnp.sqrt(6.0 / (fan_in + fan_out))
        return jax.random.uniform(
            k, (fan_in, fan_out), jnp.float32, minval=-limit, maxval=limit
        )

    return {
        "w1": glorot(k1, in_c, hid_c1),
        "w_mu": glorot(k2, hid_c1, hid_c2),
        "w_var": glorot(k3, hid_c1, hid_c2),  # kept for parity; unused in eval forward
    }


if __name__ == "__main__":
    key = jax.random.PRNGKey(0)
    k_x, k_adj, k_p = jax.random.split(key, 3)

    N, in_c, hid_c1, hid_c2 = 16, 8, 16, 8

    x = jax.random.normal(k_x, (N, in_c), dtype=jnp.float32)

    # Symmetric normalized adjacency with self-loops (standard GCN preprocessing).
    a_raw = (jax.random.uniform(k_adj, (N, N)) > 0.7).astype(jnp.float32)
    a_sym = jnp.maximum(a_raw, a_raw.T) + jnp.eye(N, dtype=jnp.float32)
    deg = jnp.sum(a_sym, axis=1)
    d_inv_sqrt = 1.0 / jnp.sqrt(deg)
    adj = a_sym * d_inv_sqrt[:, None] * d_inv_sqrt[None, :]

    params = init_params(k_p, in_c, hid_c1, hid_c2)

    mx = vgae_forward(x, adj, params["w1"], params["w_mu"])
    jax.block_until_ready(mx)

    # Pure-JAX reference check of the same math (eval mode).
    h_ref = jnp.maximum(adj @ (x @ params["w1"]), 0.0)
    mu_ref = adj @ (h_ref @ params["w_mu"])
    mx_ref = mu_ref @ mu_ref.T
    assert mx.shape == (N, N)
    assert jnp.allclose(mx, mx_ref, atol=1e-4, rtol=1e-4)

    print("KERNEL_OK")
</pallas_src>

<mosaic_0001>
module attributes {stable_mosaic.version = 11 : i64} {
  func.func @_vgae_fused_kernel(%arg0: i32, %arg1: memref<128x128xf32, #tpu.memory_space<vmem>>, %arg2: memref<128x128xf32, #tpu.memory_space<vmem>>, %arg3: memref<128x128xf32, #tpu.memory_space<vmem>>, %arg4: memref<128x128xf32, #tpu.memory_space<vmem>>, %arg5: memref<128x128xf32, #tpu.memory_space<vmem>>, %arg6: memref<128x128xf32, #tpu.memory_space<vmem>>) attributes {dimension_semantics = [#tpu.dimension_semantics<arbitrary>], iteration_bounds = array<i64: 1>, scalar_prefetch = 0 : i64, scratch_operands = 1 : i64, tpu.core_type = #tpu.core_type<tc>, window_params = [{pipeline_mode = #tpu.pipeline_mode<synchronous>, transform_indices = @transform_0, window_bounds = array<i64: 128, 128>}, {pipeline_mode = #tpu.pipeline_mode<synchronous>, transform_indices = @transform_1, window_bounds = array<i64: 128, 128>}, {pipeline_mode = #tpu.pipeline_mode<synchronous>, transform_indices = @transform_2, window_bounds = array<i64: 128, 128>}, {pipeline_mode = #tpu.pipeline_mode<synchronous>, transform_indices = @transform_3, window_bounds = array<i64: 128, 128>}, {transform_indices = @transform_4, window_bounds = array<i64: 128, 128>}]} {
    %c0_i32 = arith.constant 0 : i32
    %0 = arith.cmpi eq, %arg0, %c0_i32 : i32
    %1 = arith.extui %0 : i1 to i32
    %c0_i32_0 = arith.constant 0 : i32
    %2 = arith.cmpi ne, %1, %c0_i32_0 : i32
    scf.if %2 {
      %c0_5 = arith.constant 0 : index
      %c0_6 = arith.constant 0 : index
      %10 = vector.load %arg2[%c0_5, %c0_6] : memref<128x128xf32, #tpu.memory_space<vmem>>, vector<128x128xf32>
      %c0_7 = arith.constant 0 : index
      %c0_8 = arith.constant 0 : index
      %11 = vector.load %arg1[%c0_7, %c0_8] : memref<128x128xf32, #tpu.memory_space<vmem>>, vector<128x128xf32>
      %c0_9 = arith.constant 0 : index
      %c0_10 = arith.constant 0 : index
      %12 = vector.load %arg3[%c0_9, %c0_10] : memref<128x128xf32, #tpu.memory_space<vmem>>, vector<128x128xf32>
      %cst_11 = arith.constant dense<0.000000e+00> : vector<128x128xf32>
      %13 = tpu.matmul %11, %12, %cst_11 {dimension_numbers = #tpu.dot_dimension_numbers<[1], [0], [0], [1], [0, 0, 1, 1], [], []>} : vector<128x128xf32>, vector<128x128xf32>, vector<128x128xf32> -> vector<128x128xf32>
      %cst_12 = arith.constant dense<0.000000e+00> : vector<128x128xf32>
      %14 = tpu.matmul %10, %13, %cst_12 {dimension_numbers = #tpu.dot_dimension_numbers<[1], [0], [0], [1], [0, 0, 1, 1], [], []>} : vector<128x128xf32>, vector<128x128xf32>, vector<128x128xf32> -> vector<128x128xf32>
      %cst_13 = arith.constant 0.000000e+00 : f32
      %15 = vector.broadcast %cst_13 : f32 to vector<128x128xf32>
      %16 = arith.maximumf %14, %15 : vector<128x128xf32>
      %c0_14 = arith.constant 0 : index
      %c0_15 = arith.constant 0 : index
      %17 = vector.load %arg4[%c0_14, %c0_15] : memref<128x128xf32, #tpu.memory_space<vmem>>, vector<128x128xf32>
      %cst_16 = arith.constant dense<0.000000e+00> : vector<128x128xf32>
      %18 = tpu.matmul %16, %17, %cst_16 {dimension_numbers = #tpu.dot_dimension_numbers<[1], [0], [0], [1], [0, 0, 1, 1], [], []>} : vector<128x128xf32>, vector<128x128xf32>, vector<128x128xf32> -> vector<128x128xf32>
      %cst_17 = arith.constant dense<0.000000e+00> : vector<128x128xf32>
      %19 = tpu.matmul %10, %18, %cst_17 {dimension_numbers = #tpu.dot_dimension_numbers<[1], [0], [0], [1], [0, 0, 1, 1], [], []>} : vector<128x128xf32>, vector<128x128xf32>, vector<128x128xf32> -> vector<128x128xf32>
      %c0_18 = arith.constant 0 : index
      %c0_19 = arith.constant 0 : index
      %20 = vector.load %arg6[%c0_18, %c0_19] : memref<128x128xf32, #tpu.memory_space<vmem>>, vector<128x128xf32>
      tpu.vector_store %arg6[%c0_18, %c0_19], %19 {strides = array<i32>} : memref<128x128xf32, #tpu.memory_space<vmem>>, vector<128x128xf32>,
    } else {
    }
    %c128_i32 = arith.constant 128 : i32
    %3 = arith.muli %arg0, %c128_i32 : i32
    %4 = tpu.assume_multiple %3, 128 : i32
    %5 = arith.index_cast %4 : i32 to index
    %c0 = arith.constant 0 : index
    %6 = vector.load %arg6[%5, %c0] : memref<128x128xf32, #tpu.memory_space<vmem>>, vector<128x128xf32>
    %c0_1 = arith.constant 0 : index
    %c0_2 = arith.constant 0 : index
    %7 = vector.load %arg6[%c0_1, %c0_2] : memref<128x128xf32, #tpu.memory_space<vmem>>, vector<128x128xf32>
    %cst = arith.constant dense<0.000000e+00> : vector<128x128xf32>
    %8 = tpu.matmul %6, %7, %cst {dimension_numbers = #tpu.dot_dimension_numbers<[1], [1], [0], [0], [0, 0, 1, 0], [], []>} : vector<128x128xf32>, vector<128x128xf32>, vector<128x128xf32> -> vector<128x128xf32>
    %c0_3 = arith.constant 0 : index
    %c0_4 = arith.constant 0 : index
    %9 = vector.load %arg5[%c0_3, %c0_4] : memref<128x128xf32, #tpu.memory_space<vmem>>, vector<128x128xf32>
    tpu.vector_store %arg5[%c0_3, %c0_4], %8 {strides = array<i32>} : memref<128x128xf32, #tpu.memory_space<vmem>>, vector<128x128xf32>,
    return
  }
  func.func @transform_0(%arg0: i32) -> (i32, i32) {
    %c0_i32 = arith.constant 0 : i32
    %c0_i32_0 = arith.constant 0 : i32
    %c0_i32_1 = arith.constant 0 : i32
    return %c0_i32, %c0_i32_0 : i32, i32
  }
  func.func @transform_1(%arg0: i32) -> (i32, i32) {
    %c0_i32 = arith.constant 0 : i32
    %c0_i32_0 = arith.constant 0 : i32
    %c0_i32_1 = arith.constant 0 : i32
    return %c0_i32, %c0_i32_0 : i32, i32
  }
  func.func @transform_2(%arg0: i32) -> (i32, i32) {
    %c0_i32 = arith.constant 0 : i32
    %c0_i32_0 = arith.constant 0 : i32
    %c0_i32_1 = arith.constant 0 : i32
    return %c0_i32, %c0_i32_0 : i32, i32
  }
  func.func @transform_3(%arg0: i32) -> (i32, i32) {
    %c0_i32 = arith.constant 0 : i32
    %c0_i32_0 = arith.constant 0 : i32
    %c0_i32_1 = arith.constant 0 : i32
    return %c0_i32, %c0_i32_0 : i32, i32
  }
  func.func @transform_4(%arg0: i32) -> (i32, i32) {
    %c0_i32 = arith.constant 0 : i32
    %c0_i32_0 = arith.constant 0 : i32
    return %arg0, %c0_i32 : i32, i32
  }
}

</mosaic_0001>

<llo_original>
// kernel: vgae_forward.1
$region0: #{vgae_forward.1}
  #allocation0 [shape = 'u32[]', space=smem, size = 0x4, offset = 0x4, fixed_abs, tag = 'smem constant byte address 0x4 - core index']
  #allocation1 [shape = 'u32[72,128]{1,0:T(1,128)}', space=vmem, size = 0x9000, scoped, tag = 'internal scratch']
  #allocation2 [shape = 'f32[128,128]{1,0:T(8,128)}', space=vmem, size = 0x10000, scoped, tag = 'scratch operand']
  %s0 = inlined_call_operand.vmem [shape: f32[128,128], index: 0, kind: input, shape index: {}]
  %s1 = inlined_call_operand.vmem [shape: f32[128,128], index: 1, kind: input, shape index: {}]
  %s2 = inlined_call_operand.vmem [shape: f32[128,128], index: 2, kind: input, shape index: {}]
  %s3 = inlined_call_operand.vmem [shape: f32[128,128], index: 3, kind: input, shape index: {}]
  %s4 = inlined_call_operand.vmem [shape: f32[128,128], index: 4, kind: output, shape index: {}]
  %s5 = sld [smem:[#allocation0]]
  $region30: #{vgae_forward.1} parent=0
    _
  %s7 = ssub.s32 1, %s5
  %s8 = scalar_select 0, %s7, %s5
  // Predicated region
  $region2: #{vgae_forward.1} parent=0 // pred_check
    _
  $region3: #{vgae_forward.1} parent=0 // pred_check_branch
    %10 = sbr.rel (0) target = $region5
  $region4: #{vgae_forward.1} parent=0 // pred_region
    _
  $region5: #{vgae_forward.1} parent=0 // pred_fallthru
    _
  // Predicated region
  $region6: #{vgae_forward.1} parent=0 // pred_check
    _
  $region7: #{vgae_forward.1} parent=0 // pred_check_branch
    %12 = sbr.rel (0) target = $region9
  $region8: #{vgae_forward.1} parent=0 // pred_region
    _
  $region9: #{vgae_forward.1} parent=0 // pred_fallthru
    _
  // Predicated region
  $region10: #{vgae_forward.1} parent=0 // pred_check
    _
  $region11: #{vgae_forward.1} parent=0 // pred_check_branch
    %14 = sbr.rel (0) target = $region13
  $region12: #{vgae_forward.1} parent=0 // pred_region
    _
  $region13: #{vgae_forward.1} parent=0 // pred_fallthru
    _
  // Predicated region
  $region14: #{vgae_forward.1} parent=0 // pred_check
    _
  $region15: #{vgae_forward.1} parent=0 // pred_check_branch
    %16 = sbr.rel (0) target = $region17
  $region16: #{vgae_forward.1} parent=0 // pred_region
    _
  $region17: #{vgae_forward.1} parent=0 // pred_fallthru
    _
  %p17 = scmp.eq.s32.totalorder 0, 0
  // Predicated region
  $region18: #{vgae_forward.1} parent=0 // pred_check
    %p18 = pneg %p17
  $region19: #{vgae_forward.1} parent=0 // pred_check_branch
    %20 = sbr.rel (%p18) target = $region21
  $region20: #{vgae_forward.1} parent=0 // pred_region
    %v21 = vld [vmem:[%s1] sm:$0xff]
    %v22 = vld [vmem:[%s1 + $0x8] sm:$0xff]
    %v23 = vld [vmem:[%s1 + $0x10] sm:$0xff]
    %v24 = vld [vmem:[%s1 + $0x18] sm:$0xff]
    %v25 = vld [vmem:[%s1 + $0x20] sm:$0xff]
    %v26 = vld [vmem:[%s1 + $0x28] sm:$0xff]
    %v27 = vld [vmem:[%s1 + $0x30] sm:$0xff]
    %v28 = vld [vmem:[%s1 + $0x38] sm:$0xff]
    %v29 = vld [vmem:[%s1 + $0x40] sm:$0xff]
    %v30 = vld [vmem:[%s1 + $0x48] sm:$0xff]
    %v31 = vld [vmem:[%s1 + $0x50] sm:$0xff]
    %v32 = vld [vmem:[%s1 + $0x58] sm:$0xff]
    %v33 = vld [vmem:[%s1 + $0x60] sm:$0xff]
    %v34 = vld [vmem:[%s1 + $0x68] sm:$0xff]
    %v35 = vld [vmem:[%s1 + $0x70] sm:$0xff]
    %v36 = vld [vmem:[%s1 + $0x78] sm:$0xff]
    %v37 = vld [vmem:[%s0] sm:$0xff]
    %v38 = vld [vmem:[%s0 + $0x8] sm:$0xff]
    %v39 = vld [vmem:[%s0 + $0x10] sm:$0xff]
    %v40 = vld [vmem:[%s0 + $0x18] sm:$0xff]
    %v41 = vld [vmem:[%s0 + $0x20] sm:$0xff]
    %v42 = vld [vmem:[%s0 + $0x28] sm:$0xff]
    %v43 = vld [vmem:[%s0 + $0x30] sm:$0xff]
    %v44 = vld [vmem:[%s0 + $0x38] sm:$0xff]
    %v45 = vld [vmem:[%s0 + $0x40] sm:$0xff]
    %v46 = vld [vmem:[%s0 + $0x48] sm:$0xff]
    %v47 = vld [vmem:[%s0 + $0x50] sm:$0xff]
    %v48 = vld [vmem:[%s0 + $0x58] sm:$0xff]
    %v49 = vld [vmem:[%s0 + $0x60] sm:$0xff]
    %v50 = vld [vmem:[%s0 + $0x68] sm:$0xff]
    %v51 = vld [vmem:[%s0 + $0x70] sm:$0xff]
    %v52 = vld [vmem:[%s0 + $0x78] sm:$0xff]
    %v53 = vld [vmem:[%s2] sm:$0xff]
    %v54 = vld [vmem:[%s2 + $0x8] sm:$0xff]
    %v55 = vld [vmem:[%s2 + $0x10] sm:$0xff]
    %v56 = vld [vmem:[%s2 + $0x18] sm:$0xff]
    %v57 = vld [vmem:[%s2 + $0x20] sm:$0xff]
    %v58 = vld [vmem:[%s2 + $0x28] sm:$0xff]
    %v59 = vld [vmem:[%s2 + $0x30] sm:$0xff]
    %v60 = vld [vmem:[%s2 + $0x38] sm:$0xff]
    %v61 = vld [vmem:[%s2 + $0x40] sm:$0xff]
    %v62 = vld [vmem:[%s2 + $0x48] sm:$0xff]
    %v63 = vld [vmem:[%s2 + $0x50] sm:$0xff]
    %v64 = vld [vmem:[%s2 + $0x58] sm:$0xff]
    %v65 = vld [vmem:[%s2 + $0x60] sm:$0xff]
    %v66 = vld [vmem:[%s2 + $0x68] sm:$0xff]
    %v67 = vld [vmem:[%s2 + $0x70] sm:$0xff]
    %v68 = vld [vmem:[%s2 + $0x78] sm:$0xff]
    %69 = vmatpush.msra.mxu0 %v68
    %70 = vmatpush.msra.mxu0 %v67
    %71 = vmatpush.msra.mxu0 %v66
    %72 = vmatpush.msra.mxu0 %v65
    %73 = vmatpush.msra.mxu0 %v64
    %74 = vmatpush.msra.mxu0 %v63
    %75 = vmatpush.msra.mxu0 %v62
    %76 = vmatpush.msra.mxu0 %v61
    %77 = vmatpush.msra.mxu0 %v60
    %78 = vmatpush.msra.mxu0 %v59
    %79 = vmatpush.msra.mxu0 %v58
    %80 = vmatpush.msra.mxu0 %v57
    %81 = vmatpush.msra.mxu0 %v56
    %82 = vmatpush.msra.mxu0 %v55
    %83 = vmatpush.msra.mxu0 %v54
    %84 = vmatpush.msra.mxu0 %v53
    %85 = vmatmul.f32.gmra.mxu0 %v37
    %v86 = vpop.f32.mrf.mxu0
    %v87 = vadd.f32 0.0, %v86
    %88 = vmatmul.f32.gmra.mxu0 %v38
    %v89 = vpop.f32.mrf.mxu0
    %v90 = vadd.f32 0.0, %v89
    %91 = vmatmul.f32.gmra.mxu0 %v39
    %v92 = vpop.f32.mrf.mxu0
    %v93 = vadd.f32 0.0, %v92
    %94 = vmatmul.f32.gmra.mxu0 %v40
    %v95 = vpop.f32.mrf.mxu0
    %v96 = vadd.f32 0.0, %v95
    %97 = vmatmul.f32.gmra.mxu0 %v41
    %v98 = vpop.f32.mrf.mxu0
    %v99 = vadd.f32 0.0, %v98
    %100 = vmatmul.f32.gmra.mxu0 %v42
    %v101 = vpop.f32.mrf.mxu0
    %v102 = vadd.f32 0.0, %v101
    %103 = vmatmul.f32.gmra.mxu0 %v43
    %v104 = vpop.f32.mrf.mxu0
    %v105 = vadd.f32 0.0, %v104
    %106 = vmatmul.f32.gmra.mxu0 %v44
    %v107 = vpop.f32.mrf.mxu0
    %v108 = vadd.f32 0.0, %v107
    %109 = vmatmul.f32.gmra.mxu0 %v45
    %v110 = vpop.f32.mrf.mxu0
    %v111 = vadd.f32 0.0, %v110
    %112 = vmatmul.f32.gmra.mxu0 %v46
    %v113 = vpop.f32.mrf.mxu0
    %v114 = vadd.f32 0.0, %v113
    %115 = vmatmul.f32.gmra.mxu0 %v47
    %v116 = vpop.f32.mrf.mxu0
    %v117 = vadd.f32 0.0, %v116
    %118 = vmatmul.f32.gmra.mxu0 %v48
    %v119 = vpop.f32.mrf.mxu0
    %v120 = vadd.f32 0.0, %v119
    %121 = vmatmul.f32.gmra.mxu0 %v49
    %v122 = vpop.f32.mrf.mxu0
    %v123 = vadd.f32 0.0, %v122
    %124 = vmatmul.f32.gmra.mxu0 %v50
    %v125 = vpop.f32.mrf.mxu0
    %v126 = vadd.f32 0.0, %v125
    %127 = vmatmul.f32.gmra.mxu0 %v51
    %v128 = vpop.f32.mrf.mxu0
    %v129 = vadd.f32 0.0, %v128
    %130 = vmatmul.f32.gmra.mxu0 %v52
    %v131 = vpop.f32.mrf.mxu0
    %v132 = vadd.f32 0.0, %v131
    %133 = vdwg.mxu0
    %134 = vmatpush.msra.mxu0 %v132
    %135 = vmatpush.msra.mxu0 %v129
    %136 = vmatpush.msra.mxu0 %v126
    %137 = vmatpush.msra.mxu0 %v123
    %138 = vmatpush.msra.mxu0 %v120
    %139 = vmatpush.msra.mxu0 %v117
    %140 = vmatpush.msra.mxu0 %v114
    %141 = vmatpush.msra.mxu0 %v111
    %142 = vmatpush.msra.mxu0 %v108
    %143 = vmatpush.msra.mxu0 %v105
    %144 = vmatpush.msra.mxu0 %v102
    %145 = vmatpush.msra.mxu0 %v99
    %146 = vmatpush.msra.mxu0 %v96
    %147 = vmatpush.msra.mxu0 %v93
    %148 = vmatpush.msra.mxu0 %v90
    %149 = vmatpush.msra.mxu0 %v87
    %150 = vmatmul.f32.gmra.mxu0 %v21
    %v151 = vpop.f32.mrf.mxu0
    %v152 = vadd.f32 0.0, %v151
    %153 = vmatmul.f32.gmra.mxu0 %v22
    %v154 = vpop.f32.mrf.mxu0
    %v155 = vadd.f32 0.0, %v154
    %156 = vmatmul.f32.gmra.mxu0 %v23
    %v157 = vpop.f32.mrf.mxu0
    %v158 = vadd.f32 0.0, %v157
    %159 = vmatmul.f32.gmra.mxu0 %v24
    %v160 = vpop.f32.mrf.mxu0
    %v161 = vadd.f32 0.0, %v160
    %162 = vmatmul.f32.gmra.mxu0 %v25
    %v163 = vpop.f32.mrf.mxu0
    %v164 = vadd.f32 0.0, %v163
    %165 = vmatmul.f32.gmra.mxu0 %v26
    %v166 = vpop.f32.mrf.mxu0
    %v167 = vadd.f32 0.0, %v166
    %168 = vmatmul.f32.gmra.mxu0 %v27
    %v169 = vpop.f32.mrf.mxu0
    %v170 = vadd.f32 0.0, %v169
    %171 = vmatmul.f32.gmra.mxu0 %v28
    %v172 = vpop.f32.mrf.mxu0
    %v173 = vadd.f32 0.0, %v172
    %174 = vmatmul.f32.gmra.mxu0 %v29
    %v175 = vpop.f32.mrf.mxu0
    %v176 = vadd.f32 0.0, %v175
    %177 = vmatmul.f32.gmra.mxu0 %v30
    %v178 = vpop.f32.mrf.mxu0
    %v179 = vadd.f32 0.0, %v178
    %180 = vmatmul.f32.gmra.mxu0 %v31
    %v181 = vpop.f32.mrf.mxu0
    %v182 = vadd.f32 0.0, %v181
    %183 = vmatmul.f32.gmra.mxu0 %v32
    %v184 = vpop.f32.mrf.mxu0
    %v185 = vadd.f32 0.0, %v184
    %186 = vmatmul.f32.gmra.mxu0 %v33
    %v187 = vpop.f32.mrf.mxu0
    %v188 = vadd.f32 0.0, %v187
    %189 = vmatmul.f32.gmra.mxu0 %v34
    %v190 = vpop.f32.mrf.mxu0
    %v191 = vadd.f32 0.0, %v190
    %192 = vmatmul.f32.gmra.mxu0 %v35
    %v193 = vpop.f32.mrf.mxu0
    %v194 = vadd.f32 0.0, %v193
    %195 = vmatmul.f32.gmra.mxu0 %v36
    %v196 = vpop.f32.mrf.mxu0
    %v197 = vadd.f32 0.0, %v196
    %198 = vdwg.mxu0
    %v199 = vmax.f32 %v152, 0.0
    %v200 = vmax.f32 %v155, 0.0
    %v201 = vmax.f32 %v158, 0.0
    %v202 = vmax.f32 %v161, 0.0
    %v203 = vmax.f32 %v164, 0.0
    %v204 = vmax.f32 %v167, 0.0
    %v205 = vmax.f32 %v170, 0.0
    %v206 = vmax.f32 %v173, 0.0
    %v207 = vmax.f32 %v176, 0.0
    %v208 = vmax.f32 %v179, 0.0
    %v209 = vmax.f32 %v182, 0.0
    %v210 = vmax.f32 %v185, 0.0
    %v211 = vmax.f32 %v188, 0.0
    %v212 = vmax.f32 %v191, 0.0
    %v213 = vmax.f32 %v194, 0.0
    %v214 = vmax.f32 %v197, 0.0
    %v215 = vld [vmem:[%s3] sm:$0xff]
    %v216 = vld [vmem:[%s3 + $0x8] sm:$0xff]
    %v217 = vld [vmem:[%s3 + $0x10] sm:$0xff]
    %v218 = vld [vmem:[%s3 + $0x18] sm:$0xff]
    %v219 = vld [vmem:[%s3 + $0x20] sm:$0xff]
    %v220 = vld [vmem:[%s3 + $0x28] sm:$0xff]
    %v221 = vld [vmem:[%s3 + $0x30] sm:$0xff]
    %v222 = vld [vmem:[%s3 + $0x38] sm:$0xff]
    %v223 = vld [vmem:[%s3 + $0x40] sm:$0xff]
    %v224 = vld [vmem:[%s3 + $0x48] sm:$0xff]
    %v225 = vld [vmem:[%s3 + $0x50] sm:$0xff]
    %v226 = vld [vmem:[%s3 + $0x58] sm:$0xff]
    %v227 = vld [vmem:[%s3 + $0x60] sm:$0xff]
    %v228 = vld [vmem:[%s3 + $0x68] sm:$0xff]
    %v229 = vld [vmem:[%s3 + $0x70] sm:$0xff]
    %v230 = vld [vmem:[%s3 + $0x78] sm:$0xff]
    %231 = vmatpush.msra.mxu0 %v230
    %232 = vmatpush.msra.mxu0 %v229
    %233 = vmatpush.msra.mxu0 %v228
    %234 = vmatpush.msra.mxu0 %v227
    %235 = vmatpush.msra.mxu0 %v226
    %236 = vmatpush.msra.mxu0 %v225
    %237 = vmatpush.msra.mxu0 %v224
    %238 = vmatpush.msra.mxu0 %v223
    %239 = vmatpush.msra.mxu0 %v222
    %240 = vmatpush.msra.mxu0 %v221
    %241 = vmatpush.msra.mxu0 %v220
    %242 = vmatpush.msra.mxu0 %v219
    %243 = vmatpush.msra.mxu0 %v218
    %244 = vmatpush.msra.mxu0 %v217
    %245 = vmatpush.msra.mxu0 %v216
    %246 = vmatpush.msra.mxu0 %v215
    %247 = vmatmul.f32.gmra.mxu0 %v199
    %v248 = vpop.f32.mrf.mxu0
    %v249 = vadd.f32 0.0, %v248
    %250 = vmatmul.f32.gmra.mxu0 %v200
    %v251 = vpop.f32.mrf.mxu0
    %v252 = vadd.f32 0.0, %v251
    %253 = vmatmul.f32.gmra.mxu0 %v201
    %v254 = vpop.f32.mrf.mxu0
    %v255 = vadd.f32 0.0, %v254
    %256 = vmatmul.f32.gmra.mxu0 %v202
    %v257 = vpop.f32.mrf.mxu0
    %v258 = vadd.f32 0.0, %v257
    %259 = vmatmul.f32.gmra.mxu0 %v203
    %v260 = vpop.f32.mrf.mxu0
    %v261 = vadd.f32 0.0, %v260
    %262 = vmatmul.f32.gmra.mxu0 %v204
    %v263 = vpop.f32.mrf.mxu0
    %v264 = vadd.f32 0.0, %v263
    %265 = vmatmul.f32.gmra.mxu0 %v205
    %v266 = vpop.f32.mrf.mxu0
    %v267 = vadd.f32 0.0, %v266
    %268 = vmatmul.f32.gmra.mxu0 %v206
    %v269 = vpop.f32.mrf.mxu0
    %v270 = vadd.f32 0.0, %v269
    %271 = vmatmul.f32.gmra.mxu0 %v207
    %v272 = vpop.f32.mrf.mxu0
    %v273 = vadd.f32 0.0, %v272
    %274 = vmatmul.f32.gmra.mxu0 %v208
    %v275 = vpop.f32.mrf.mxu0
    %v276 = vadd.f32 0.0, %v275
    %277 = vmatmul.f32.gmra.mxu0 %v209
    %v278 = vpop.f32.mrf.mxu0
    %v279 = vadd.f32 0.0, %v278
    %280 = vmatmul.f32.gmra.mxu0 %v210
    %v281 = vpop.f32.mrf.mxu0
    %v282 = vadd.f32 0.0, %v281
    %283 = vmatmul.f32.gmra.mxu0 %v211
    %v284 = vpop.f32.mrf.mxu0
    %v285 = vadd.f32 0.0, %v284
    %286 = vmatmul.f32.gmra.mxu0 %v212
    %v287 = vpop.f32.mrf.mxu0
    %v288 = vadd.f32 0.0, %v287
    %289 = vmatmul.f32.gmra.mxu0 %v213
    %v290 = vpop.f32.mrf.mxu0
    %v291 = vadd.f32 0.0, %v290
    %292 = vmatmul.f32.gmra.mxu0 %v214
    %v293 = vpop.f32.mrf.mxu0
    %v294 = vadd.f32 0.0, %v293
    %295 = vdwg.mxu0
    %296 = vmatpush.msra.mxu0 %v294
    %297 = vmatpush.msra.mxu0 %v291
    %298 = vmatpush.msra.mxu0 %v288
    %299 = vmatpush.msra.mxu0 %v285
    %300 = vmatpush.msra.mxu0 %v282
    %301 = vmatpush.msra.mxu0 %v279
    %302 = vmatpush.msra.mxu0 %v276
    %303 = vmatpush.msra.mxu0 %v273
    %304 = vmatpush.msra.mxu0 %v270
    %305 = vmatpush.msra.mxu0 %v267
    %306 = vmatpush.msra.mxu0 %v264
    %307 = vmatpush.msra.mxu0 %v261
    %308 = vmatpush.msra.mxu0 %v258
    %309 = vmatpush.msra.mxu0 %v255
    %310 = vmatpush.msra.mxu0 %v252
    %311 = vmatpush.msra.mxu0 %v249
    %312 = vmatmul.f32.gmra.mxu0 %v21
    %v313 = vpop.f32.mrf.mxu0
    %v314 = vadd.f32 0.0, %v313
    %315 = vmatmul.f32.gmra.mxu0 %v22
    %v316 = vpop.f32.mrf.mxu0
    %v317 = vadd.f32 0.0, %v316
    %318 = vmatmul.f32.gmra.mxu0 %v23
    %v319 = vpop.f32.mrf.mxu0
    %v320 = vadd.f32 0.0, %v319
    %321 = vmatmul.f32.gmra.mxu0 %v24
    %v322 = vpop.f32.mrf.mxu0
    %v323 = vadd.f32 0.0, %v322
    %324 = vmatmul.f32.gmra.mxu0 %v25
    %v325 = vpop.f32.mrf.mxu0
    %v326 = vadd.f32 0.0, %v325
    %327 = vmatmul.f32.gmra.mxu0 %v26
    %v328 = vpop.f32.mrf.mxu0
    %v329 = vadd.f32 0.0, %v328
    %330 = vmatmul.f32.gmra.mxu0 %v27
    %v331 = vpop.f32.mrf.mxu0
    %v332 = vadd.f32 0.0, %v331
    %333 = vmatmul.f32.gmra.mxu0 %v28
    %v334 = vpop.f32.mrf.mxu0
    %v335 = vadd.f32 0.0, %v334
    %336 = vmatmul.f32.gmra.mxu0 %v29
    %v337 = vpop.f32.mrf.mxu0
    %v338 = vadd.f32 0.0, %v337
    %339 = vmatmul.f32.gmra.mxu0 %v30
    %v340 = vpop.f32.mrf.mxu0
    %v341 = vadd.f32 0.0, %v340
    %342 = vmatmul.f32.gmra.mxu0 %v31
    %v343 = vpop.f32.mrf.mxu0
    %v344 = vadd.f32 0.0, %v343
    %345 = vmatmul.f32.gmra.mxu0 %v32
    %v346 = vpop.f32.mrf.mxu0
    %v347 = vadd.f32 0.0, %v346
    %348 = vmatmul.f32.gmra.mxu0 %v33
    %v349 = vpop.f32.mrf.mxu0
    %v350 = vadd.f32 0.0, %v349
    %351 = vmatmul.f32.gmra.mxu0 %v34
    %v352 = vpop.f32.mrf.mxu0
    %v353 = vadd.f32 0.0, %v352
    %354 = vmatmul.f32.gmra.mxu0 %v35
    %v355 = vpop.f32.mrf.mxu0
    %v356 = vadd.f32 0.0, %v355
    %357 = vmatmul.f32.gmra.mxu0 %v36
    %v358 = vpop.f32.mrf.mxu0
    %v359 = vadd.f32 0.0, %v358
    %360 = vdwg.mxu0
    %361 = vst [vmem:[#allocation2] sm:$0xff] %v314
    %362 = vst [vmem:[#allocation2 + $0x8] sm:$0xff] %v317
    %363 = vst [vmem:[#allocation2 + $0x10] sm:$0xff] %v320
    %364 = vst [vmem:[#allocation2 + $0x18] sm:$0xff] %v323
    %365 = vst [vmem:[#allocation2 + $0x20] sm:$0xff] %v326
    %366 = vst [vmem:[#allocation2 + $0x28] sm:$0xff] %v329
    %367 = vst [vmem:[#allocation2 + $0x30] sm:$0xff] %v332
    %368 = vst [vmem:[#allocation2 + $0x38] sm:$0xff] %v335
    %369 = vst [vmem:[#allocation2 + $0x40] sm:$0xff] %v338
    %370 = vst [vmem:[#allocation2 + $0x48] sm:$0xff] %v341
    %371 = vst [vmem:[#allocation2 + $0x50] sm:$0xff] %v344
    %372 = vst [vmem:[#allocation2 + $0x58] sm:$0xff] %v347
    %373 = vst [vmem:[#allocation2 + $0x60] sm:$0xff] %v350
    %374 = vst [vmem:[#allocation2 + $0x68] sm:$0xff] %v353
    %375 = vst [vmem:[#allocation2 + $0x70] sm:$0xff] %v356
    %376 = vst [vmem:[#allocation2 + $0x78] sm:$0xff] %v359
  $region21: #{vgae_forward.1} parent=0 // pred_fallthru
    _
  %s377 = smul.u32 0, 128
  %s378 = scalar_lea.vmem [#allocation2], %s377
  %v379 = vld [vmem:[%s378] sm:$0xff]
  %v380 = vld [vmem:[%s378 + $0x8] sm:$0xff]
  %v381 = vld [vmem:[%s378 + $0x10] sm:$0xff]
  %v382 = vld [vmem:[%s378 + $0x18] sm:$0xff]
  %v383 = vld [vmem:[%s378 + $0x20] sm:$0xff]
  %v384 = vld [vmem:[%s378 + $0x28] sm:$0xff]
  %v385 = vld [vmem:[%s378 + $0x30] sm:$0xff]
  %v386 = vld [vmem:[%s378 + $0x38] sm:$0xff]
  %v387 = vld [vmem:[%s378 + $0x40] sm:$0xff]
  %v388 = vld [vmem:[%s378 + $0x48] sm:$0xff]
  %v389 = vld [vmem:[%s378 + $0x50] sm:$0xff]
  %v390 = vld [vmem:[%s378 + $0x58] sm:$0xff]
  %v391 = vld [vmem:[%s378 + $0x60] sm:$0xff]
  %v392 = vld [vmem:[%s378 + $0x68] sm:$0xff]
  %v393 = vld [vmem:[%s378 + $0x70] sm:$0xff]
  %v394 = vld [vmem:[%s378 + $0x78] sm:$0xff]
  %v395 = vld [vmem:[#allocation2] sm:$0xff]
  %v396 = vld [vmem:[#allocation2 + $0x8] sm:$0xff]
  %v397 = vld [vmem:[#allocation2 + $0x10] sm:$0xff]
  %v398 = vld [vmem:[#allocation2 + $0x18] sm:$0xff]
  %v399 = vld [vmem:[#allocation2 + $0x20] sm:$0xff]
  %v400 = vld [vmem:[#allocation2 + $0x28] sm:$0xff]
  %v401 = vld [vmem:[#allocation2 + $0x30] sm:$0xff]
  %v402 = vld [vmem:[#allocation2 + $0x38] sm:$0xff]
  %v403 = vld [vmem:[#allocation2 + $0x40] sm:$0xff]
  %v404 = vld [vmem:[#allocation2 + $0x48] sm:$0xff]
  %v405 = vld [vmem:[#allocation2 + $0x50] sm:$0xff]
  %v406 = vld [vmem:[#allocation2 + $0x58] sm:$0xff]
  %v407 = vld [vmem:[#allocation2 + $0x60] sm:$0xff]
  %v408 = vld [vmem:[#allocation2 + $0x68] sm:$0xff]
  %v409 = vld [vmem:[#allocation2 + $0x70] sm:$0xff]
  %v410 = vld [vmem:[#allocation2 + $0x78] sm:$0xff]
  %411 = vmatpush.xpose.msra.mxu0 %v410
  %412 = vmatpush.xpose.msra.mxu0 %v409
  %413 = vmatpush.xpose.msra.mxu0 %v408
  %414 = vmatpush.xpose.msra.mxu0 %v407
  %415 = vmatpush.xpose.msra.mxu0 %v406
  %416 = vmatpush.xpose.msra.mxu0 %v405
  %417 = vmatpush.xpose.msra.mxu0 %v404
  %418 = vmatpush.xpose.msra.mxu0 %v403
  %419 = vmatpush.xpose.msra.mxu0 %v402
  %420 = vmatpush.xpose.msra.mxu0 %v401
  %421 = vmatpush.xpose.msra.mxu0 %v400
  %422 = vmatpush.xpose.msra.mxu0 %v399
  %423 = vmatpush.xpose.msra.mxu0 %v398
  %424 = vmatpush.xpose.msra.mxu0 %v397
  %425 = vmatpush.xpose.msra.mxu0 %v396
  %426 = vmatpush.xpose.msra.mxu0 %v395
  %427 = vmatmul.f32.gmra.mxu0 %v379
  %v428 = vpop.f32.mrf.mxu0
  %v429 = vadd.f32 0.0, %v428
  %430 = vmatmul.f32.gmra.mxu0 %v380
  %v431 = vpop.f32.mrf.mxu0
  %v432 = vadd.f32 0.0, %v431
  %433 = vmatmul.f32.gmra.mxu0 %v381
  %v434 = vpop.f32.mrf.mxu0
  %v435 = vadd.f32 0.0, %v434
  %436 = vmatmul.f32.gmra.mxu0 %v382
  %v437 = vpop.f32.mrf.mxu0
  %v438 = vadd.f32 0.0, %v437
  %439 = vmatmul.f32.gmra.mxu0 %v383
  %v440 = vpop.f32.mrf.mxu0
  %v441 = vadd.f32 0.0, %v440
  %442 = vmatmul.f32.gmra.mxu0 %v384
  %v443 = vpop.f32.mrf.mxu0
  %v444 = vadd.f32 0.0, %v443
  %445 = vmatmul.f32.gmra.mxu0 %v385
  %v446 = vpop.f32.mrf.mxu0
  %v447 = vadd.f32 0.0, %v446
  %448 = vmatmul.f32.gmra.mxu0 %v386
  %v449 = vpop.f32.mrf.mxu0
  %v450 = vadd.f32 0.0, %v449
  %451 = vmatmul.f32.gmra.mxu0 %v387
  %v452 = vpop.f32.mrf.mxu0
  %v453 = vadd.f32 0.0, %v452
  %454 = vmatmul.f32.gmra.mxu0 %v388
  %v455 = vpop.f32.mrf.mxu0
  %v456 = vadd.f32 0.0, %v455
  %457 = vmatmul.f32.gmra.mxu0 %v389
  %v458 = vpop.f32.mrf.mxu0
  %v459 = vadd.f32 0.0, %v458
  %460 = vmatmul.f32.gmra.mxu0 %v390
  %v461 = vpop.f32.mrf.mxu0
  %v462 = vadd.f32 0.0, %v461
  %463 = vmatmul.f32.gmra.mxu0 %v391
  %v464 = vpop.f32.mrf.mxu0
  %v465 = vadd.f32 0.0, %v464
  %466 = vmatmul.f32.gmra.mxu0 %v392
  %v467 = vpop.f32.mrf.mxu0
  %v468 = vadd.f32 0.0, %v467
  %469 = vmatmul.f32.gmra.mxu0 %v393
  %v470 = vpop.f32.mrf.mxu0
  %v471 = vadd.f32 0.0, %v470
  %472 = vmatmul.f32.gmra.mxu0 %v394
  %v473 = vpop.f32.mrf.mxu0
  %v474 = vadd.f32 0.0, %v473
  %475 = vdwg.mxu0
  %476 = vst [vmem:[%s4] sm:$0xff] %v429
  %477 = vst [vmem:[%s4 + $0x8] sm:$0xff] %v432
  %478 = vst [vmem:[%s4 + $0x10] sm:$0xff] %v435
  %479 = vst [vmem:[%s4 + $0x18] sm:$0xff] %v438
  %480 = vst [vmem:[%s4 + $0x20] sm:$0xff] %v441
  %481 = vst [vmem:[%s4 + $0x28] sm:$0xff] %v444
  %482 = vst [vmem:[%s4 + $0x30] sm:$0xff] %v447
  %483 = vst [vmem:[%s4 + $0x38] sm:$0xff] %v450
  %484 = vst [vmem:[%s4 + $0x40] sm:$0xff] %v453
  %485 = vst [vmem:[%s4 + $0x48] sm:$0xff] %v456
  %486 = vst [vmem:[%s4 + $0x50] sm:$0xff] %v459
  %487 = vst [vmem:[%s4 + $0x58] sm:$0xff] %v462
  %488 = vst [vmem:[%s4 + $0x60] sm:$0xff] %v465
  %489 = vst [vmem:[%s4 + $0x68] sm:$0xff] %v468
  %490 = vst [vmem:[%s4 + $0x70] sm:$0xff] %v471
  %491 = vst [vmem:[%s4 + $0x78] sm:$0xff] %v474
  // Predicated region
  $region22: #{vgae_forward.1} parent=0 // pred_check
    _
  $region23: #{vgae_forward.1} parent=0 // pred_check_branch
    %493 = sbr.rel (0) target = $region25
  $region24: #{vgae_forward.1} parent=0 // pred_region
    _
  $region25: #{vgae_forward.1} parent=0 // pred_fallthru
    _
  // Predicated region
  $region26: #{vgae_forward.1} parent=0 // pred_check
    _
  $region27: #{vgae_forward.1} parent=0 // pred_check_branch
    %495 = sbr.rel (0) target = $region29
  $region28: #{vgae_forward.1} parent=0 // pred_region
    _
  $region29: #{vgae_forward.1} parent=0 // pred_fallthru
    _

</llo_original>
